<compile_context>
chip_gen: v7x
topology: tpu7x:2x2x1
jax: 0.10.0
libtpu: 0.0.40
codegen_flags: <defaults>
</compile_context>

<pallas_src>
import jax
import jax.numpy as jnp
from jax.experimental import pallas as pl
from jax.experimental.pallas import tpu as pltpu


def _conv1x1_kernel(x_ref, w_ref, o_ref):
    # x_ref: (1, C_in, ts) spatial tile of one image, NCHW-native
    # w_ref: (C_out, C_in) full conv weight (squeezed 1x1 kernel)
    # o_ref: (1, C_out, ts) output tile, lane-dense along the spatial axis
    o_ref[0] = jnp.dot(
        w_ref[...], x_ref[0], preferred_element_type=jnp.float32
    ).astype(o_ref.dtype)


def _pick_spatial_tile(hw, target):
    """Largest multiple of 128 that divides hw and is <= target.

    If hw is not a multiple of 128 we fall back to the full spatial extent
    (block dim == full array dim is always legal), avoiding padding entirely.
    """
    if hw % 128 != 0:
        return hw
    best = 128
    t = 128
    while t <= min(target, hw):
        if hw % t == 0:
            best = t
        t += 128
    return best


def bisenet_output_forward(x_nchw, weight_oi, *, spatial_tile=1024,
                           compute_dtype=None):
    """x_nchw: (N, C_in, H, W); weight_oi: (C_out, C_in) (1x1 conv weight squeezed)."""
    N, C_in, H, W = x_nchw.shape
    C_out = weight_oi.shape[0]
    HW = H * W

    if compute_dtype is not None:
        x_nchw = x_nchw.astype(compute_dtype)
        weight_oi = weight_oi.astype(compute_dtype)

    # Free, contiguous view — no transpose, no pad, no extra HBM pass.
    x = x_nchw.reshape(N, C_in, HW)

    ts = _pick_spatial_tile(HW, spatial_tile)
    grid = (N, pl.cdiv(HW, ts))

    itemsize = jnp.dtype(x.dtype).itemsize
    cost = pl.CostEstimate(
        flops=2 * N * HW * C_in * C_out,
        transcendentals=0,
        bytes_accessed=itemsize * (N * HW * C_in + C_in * C_out + N * HW * C_out),
    )

    out = pl.pallas_call(
        _conv1x1_kernel,
        out_shape=jax.ShapeDtypeStruct((N, C_out, HW), x.dtype),
        grid_spec=pltpu.PrefetchScalarGridSpec(
            num_scalar_prefetch=0,
            grid=grid,
            in_specs=[
                pl.BlockSpec((1, C_in, ts), lambda n, s: (n, 0, s)),
                pl.BlockSpec((C_out, C_in), lambda n, s: (0, 0)),
            ],
            out_specs=pl.BlockSpec((1, C_out, ts), lambda n, s: (n, 0, s)),
        ),
        compiler_params=pltpu.CompilerParams(
            dimension_semantics=("parallel", "parallel"),
        ),
        cost_estimate=cost,
    )(x, weight_oi)

    return out.reshape(N, C_out, H, W)


def init_bisenet_output_params(key, mid_chan, n_classes):
    """kaiming_normal_(a=1), fan_in mode, on a (n_classes, mid_chan, 1, 1) conv weight.
    gain = sqrt(2 / (1 + a^2)) = 1, fan_in = mid_chan -> std = 1/sqrt(mid_chan)."""
    std = 1.0 / jnp.sqrt(jnp.float32(mid_chan))
    w = jax.random.normal(key, (n_classes, mid_chan), dtype=jnp.float32) * std
    return w  # bias=False in the module


if __name__ == "__main__":
    key = jax.random.PRNGKey(0)
    k_x, k_w = jax.random.split(key)

    # Small shapes consistent with the module: batch=2, mid_chan=4, H=W=16, n_classes=8
    N, mid_chan, H, W = 2, 4, 16, 16
    n_classes = 8

    x = jax.random.normal(k_x, (N, mid_chan, H, W), dtype=jnp.float32)
    weight = init_bisenet_output_params(k_w, mid_chan, n_classes)

    out = bisenet_output_forward(x, weight)
    out = jax.block_until_ready(out)

    # Sanity check against a plain-JAX reference of the 1x1 conv.
    ref = jnp.einsum("nchw,oc->nohw", x, weight)
    assert out.shape == (N, n_classes, H, W), out.shape
    assert jnp.allclose(out, ref, atol=1e-5, rtol=1e-5), "mismatch vs reference"

    print("KERNEL_OK")
</pallas_src>

<mosaic_0001>
module attributes {stable_mosaic.version = 11 : i64} {
  func.func @_conv1x1_kernel(%arg0: i32, %arg1: i32, %arg2: memref<1x4x256xf32, #tpu.memory_space<vmem>>, %arg3: memref<8x4xf32, #tpu.memory_space<vmem>>, %arg4: memref<1x8x256xf32, #tpu.memory_space<vmem>>) attributes {dimension_semantics = [#tpu.dimension_semantics<parallel>, #tpu.dimension_semantics<parallel>], iteration_bounds = array<i64: 2, 1>, scalar_prefetch = 0 : i64, scratch_operands = 0 : i64, tpu.core_type = #tpu.core_type<tc>, window_params = [{transform_indices = @transform_0, window_bounds = array<i64: 1, 4, 256>}, {pipeline_mode = #tpu.pipeline_mode<synchronous>, transform_indices = @transform_1, window_bounds = array<i64: 8, 4>}, {transform_indices = @transform_2, window_bounds = array<i64: 1, 8, 256>}]} {
    %c0 = arith.constant 0 : index
    %c0_0 = arith.constant 0 : index
    %0 = vector.load %arg3[%c0, %c0_0] : memref<8x4xf32, #tpu.memory_space<vmem>>, vector<8x4xf32>
    %c0_1 = arith.constant 0 : index
    %c0_2 = arith.constant 0 : index
    %c0_3 = arith.constant 0 : index
    %1 = vector.load %arg2[%c0_1, %c0_2, %c0_3] : memref<1x4x256xf32, #tpu.memory_space<vmem>>, vector<1x4x256xf32>
    %2 = vector.shape_cast %1 : vector<1x4x256xf32> to vector<4x256xf32>
    %cst = arith.constant dense<0.000000e+00> : vector<8x256xf32>
    %3 = tpu.matmul %0, %2, %cst {dimension_numbers = #tpu.dot_dimension_numbers<[1], [0], [0], [1], [0, 0, 1, 1], [], []>} : vector<8x4xf32>, vector<4x256xf32>, vector<8x256xf32> -> vector<8x256xf32>
    %c0_4 = arith.constant 0 : index
    %c0_5 = arith.constant 0 : index
    %c0_6 = arith.constant 0 : index
    %4 = vector.load %arg4[%c0_4, %c0_5, %c0_6] : memref<1x8x256xf32, #tpu.memory_space<vmem>>, vector<1x8x256xf32>
    %5 = vector.shape_cast %4 : vector<1x8x256xf32> to vector<8x256xf32>
    %6 = vector.shape_cast %3 : vector<8x256xf32> to vector<1x8x256xf32>
    tpu.vector_store %arg4[%c0_4, %c0_5, %c0_6], %6 {strides = array<i32>} : memref<1x8x256xf32, #tpu.memory_space<vmem>>, vector<1x8x256xf32>,
    return
  }
  func.func @transform_0(%arg0: i32, %arg1: i32) -> (i32, i32, i32) {
    %c0_i32 = arith.constant 0 : i32
    %c0_i32_0 = arith.constant 0 : i32
    return %arg0, %c0_i32, %arg1 : i32, i32, i32
  }
  func.func @transform_1(%arg0: i32, %arg1: i32) -> (i32, i32) {
    %c0_i32 = arith.constant 0 : i32
    %c0_i32_0 = arith.constant 0 : i32
    %c0_i32_1 = arith.constant 0 : i32
    return %c0_i32, %c0_i32_0 : i32, i32
  }
  func.func @transform_2(%arg0: i32, %arg1: i32) -> (i32, i32, i32) {
    %c0_i32 = arith.constant 0 : i32
    %c0_i32_0 = arith.constant 0 : i32
    return %arg0, %c0_i32, %arg1 : i32, i32, i32
  }
}

</mosaic_0001>

<llo_original>
// kernel: tpu_custom_call.1
$region0: #{tpu_custom_call.1}
  #allocation0 [shape = 'u32[]', space=smem, size = 0x4, offset = 0x4, fixed_abs, tag = 'smem constant byte address 0x4 - core index']
  #allocation1 [shape = 'u32[144,128]{1,0:T(1,128)}', space=vmem, size = 0x12000, scoped, tag = 'internal scratch']
  %s0 = inlined_call_operand.hbm [shape: f32[2,4,256], index: 0, kind: input, shape index: {}]
  %s1 = inlined_call_operand.vmem [shape: f32[8,4], index: 1, kind: input, shape index: {}]
  %s2 = inlined_call_operand.hbm [shape: f32[2,8,256], index: 2, kind: output, shape index: {}]
  %s3 = sld [smem:[#allocation0]]
  $region45: #{tpu_custom_call.1} parent=0
    _
  %s5 = ssub.s32 1, %s3
  %s6 = scalar_select 0, %s5, %s3
  $region1: #{tpu_custom_call.1} parent=0
    #allocation2 [shape = 'u8[8192]{0}', space=vmem, size = 0x2000, scoped, tag = 'input window, operand 0']
    #allocation3 [shape = 's32[2]{0}', space=sflag, size = 0x8, scoped, tag = 'scoped memory for tpu_custom_call.1']
    #allocation4 [shape = 's32[2]{0}', space=sflag, size = 0x8, scoped, tag = 'scoped memory for tpu_custom_call.1']
    #allocation5 [shape = 'u8[16384]{0}', space=vmem, size = 0x4000, scoped, tag = 'output window, operand 0']
    %7 = vsyncpa [#allocation3], 0
    %s8 = scalar_lea.sflag [#allocation3], 1
    %9 = vsyncpa %s8, 0
    %10 = vsyncpa [#allocation4], 0
    %s11 = scalar_lea.sflag [#allocation4], 1
    %12 = vsyncpa %s11, 0
    loop: start=0, step=1, limit=4
    $region2: #{tpu_custom_call.1} parent=1 // loop_pre_header
      _
    $region3: #{tpu_custom_call.1} parent=1 // loop_header
      %s14 = sphi 0, %s18
      %p15 = scmp.ge.s32.totalorder %s14, 4
      %s21 = sphi 0, %s33
      %s22 = sphi 0, %s29
      %s23 = sphi 0, %s21
      %s24 = sphi 0, %s22
      %s25 = sphi 0, %s23
      %s26 = sphi 0, %s24
      %s38 = sphi 0, %s40
      %s41 = sphi 0, %s38
      %s42 = sphi 0, %s41
      %s58 = sphi 0, %s42
      %s62 = sphi 0, %s62
      %s64 = sphi 0, %s62
      %s65 = sphi 0, %s64
      %s79 = sphi 0, %s65
      %s87 = sphi 0, %s89
      %s90 = sphi 0, %s87
      %s91 = sphi 0, %s90
      %s107 = sphi 0, %s91
    $region4: #{tpu_custom_call.1} parent=1 // loop_header_branch
      %17 = sbr.rel (%p15) target = $region8
    $region5: #{tpu_custom_call.1} parent=1 // loop_body
      %s19 = ssub.s32 %s14, 1
      %s20 = ssub.s32 %s14, 2
      %s27 = sadd.s32 1, %s22
      %p28 = scmp.ge.s32.totalorder %s27, 1
      %s29 = scalar_select %p28, 0, %s27
      %s30 = sadd.s32 1, %s21
      %s31 = scalar_select %p28, %s30, %s21
      %p32 = scmp.ge.s32.totalorder %s31, 2
      %s33 = scalar_select %p32, 0, %s31
      %s34 = ssub.s32 %s21, %s33
      %s35 = ssub.s32 %s22, %s29
      %s36 = sor.u32 %s34, %s35
      %p37 = scmp.eq.s32.totalorder %s36, 0
      %s39 = sadd.s32 %s38, 1
      %s40 = scalar_select %p37, %s38, %s39
      %p43 = pneg %p37
      %p44 = scmp.eq.s32.totalorder %s14, 1
      %p45 = por %p43, %p44
      %p46 = scmp.ne.s32.totalorder %s38, %s41
      %p47 = scmp.eq.s32.totalorder %s14, 0
      %p48 = por %p46, %p47
      %p49 = scmp.ne.s32.totalorder %s38, %s41
      %p50 = scmp.eq.s32.totalorder %s19, 1
      %p51 = por %p49, %p50
      %p52 = scmp.ne.s32.totalorder %s41, %s42
      %p53 = scmp.eq.s32.totalorder %s19, 0
      %p54 = por %p52, %p53
      %p55 = scmp.ne.s32.totalorder %s41, %s42
      %p56 = scmp.eq.s32.totalorder %s20, 1
      %p57 = por %p55, %p56
      %p59 = scmp.ne.s32.totalorder %s42, %s58
      %p60 = scmp.eq.s32.totalorder %s20, 0
      %p61 = por %p59, %p60
      %s63 = sadd.s32 %s62, 1
      %p66 = scmp.eq.s32.totalorder %s14, 1
      %p67 = scmp.ne.s32.totalorder %s62, %s64
      %p68 = scmp.eq.s32.totalorder %s14, 0
      %p69 = por %p67, %p68
      %p70 = scmp.ne.s32.totalorder %s62, %s64
      %p71 = scmp.eq.s32.totalorder %s19, 1
      %p72 = por %p70, %p71
      %p73 = scmp.ne.s32.totalorder %s64, %s65
      %p74 = scmp.eq.s32.totalorder %s19, 0
      %p75 = por %p73, %p74
      %p76 = scmp.ne.s32.totalorder %s64, %s65
      %p77 = scmp.eq.s32.totalorder %s20, 1
      %p78 = por %p76, %p77
      %p80 = scmp.ne.s32.totalorder %s65, %s79
      %p81 = scmp.eq.s32.totalorder %s20, 0
      %p82 = por %p80, %p81
      %s83 = ssub.s32 %s21, %s33
      %s84 = ssub.s32 %s22, %s29
      %s85 = sor.u32 %s83, %s84
      %p86 = scmp.eq.s32.totalorder %s85, 0
      %s88 = sadd.s32 %s87, 1
      %s89 = scalar_select %p86, %s87, %s88
      %p92 = pneg %p86
      %p93 = scmp.eq.s32.totalorder %s14, 1
      %p94 = por %p92, %p93
      %p95 = scmp.ne.s32.totalorder %s87, %s90
      %p96 = scmp.eq.s32.totalorder %s14, 0
      %p97 = por %p95, %p96
      %p98 = scmp.ne.s32.totalorder %s87, %s90
      %p99 = scmp.eq.s32.totalorder %s19, 1
      %p100 = por %p98, %p99
      %p101 = scmp.ne.s32.totalorder %s90, %s91
      %p102 = scmp.eq.s32.totalorder %s19, 0
      %p103 = por %p101, %p102
      %p104 = scmp.ne.s32.totalorder %s90, %s91
      %p105 = scmp.eq.s32.totalorder %s20, 1
      %p106 = por %p104, %p105
      %p108 = scmp.ne.s32.totalorder %s91, %s107
      %p109 = scmp.eq.s32.totalorder %s20, 0
      %p110 = por %p108, %p109
      %p111 = scmp.le.s32.totalorder 1, %s14
      %p112 = scmp.lt.s32.totalorder %s14, 3
      %p113 = pnand %p111, %p112
      %p114 = pneg %p113
      // Predicated region
      $region9: #{tpu_custom_call.1} parent=5 // pred_check
        _
      $region10: #{tpu_custom_call.1} parent=5 // pred_check_branch
        %116 = sbr.rel (%p113) target = $region12
      $region11: #{tpu_custom_call.1} parent=5 // pred_region
        %s117 = ssub.s32 %s14, 1
        // Predicated region
        $region13: #{tpu_custom_call.1} parent=11 // pred_check
          %p118 = pneg %p75
        $region14: #{tpu_custom_call.1} parent=11 // pred_check_branch
          %120 = sbr.rel (%p118) target = $region16
        $region15: #{tpu_custom_call.1} parent=11 // pred_region
          _
        $region16: #{tpu_custom_call.1} parent=11 // pred_fallthru
          _
      $region12: #{tpu_custom_call.1} parent=5 // pred_fallthru
        _
      %p121 = scmp.lt.s32.totalorder %s14, 2
      // Predicated region
      $region17: #{tpu_custom_call.1} parent=5 // pred_check
        %p122 = pneg %p121
      $region18: #{tpu_custom_call.1} parent=5 // pred_check_branch
        %124 = sbr.rel (%p122) target = $region20
      $region19: #{tpu_custom_call.1} parent=5 // pred_region
        // Predicated region
        $region21: #{tpu_custom_call.1} parent=19 // pred_check
          %p125 = pneg %p48
        $region22: #{tpu_custom_call.1} parent=19 // pred_check_branch
          %127 = sbr.rel (%p125) target = $region24
        $region23: #{tpu_custom_call.1} parent=19 // pred_region
          %s128 = sand.u32 %s38, 1
          %s129 = scalar_lea.sflag [#allocation3], %s128
          %s130 = sand.u32 %s38, 1
          %s131 = smul.addr %s130, 8
          %s132 = scalar_lea.vmem [#allocation2], %s131
          %s133 = smul.u32 2, %s22
          %s135 = ssub.s32 128, 128
          %136 = vsyncadd %s129, %s135
          %s137 = smul.addr %s21, 2
          %s138 = sadd.s32 %s133, %s137
          %s139 = smul.addr %s138, 64
          %s140 = scalar_lea.hbm %s0, %s139
          %s142 = sshll.u32 %s132, 4
          %s143 = int_to_ptr.vmem [resolvable:$true] %s142
          %145 = dma.hbm_to_vmem [thread:$0]  %s140, 128, %s143, %s129
        $region24: #{tpu_custom_call.1} parent=19 // pred_fallthru
          _
      $region20: #{tpu_custom_call.1} parent=5 // pred_fallthru
        _
      %p146 = scmp.le.s32.totalorder 1, %s14
      %p147 = scmp.lt.s32.totalorder %s14, 3
      %p148 = pnand %p146, %p147
      %p149 = pneg %p148
      // Predicated region
      $region25: #{tpu_custom_call.1} parent=5 // pred_check
        _
      $region26: #{tpu_custom_call.1} parent=5 // pred_check_branch
        %151 = sbr.rel (%p148) target = $region28
      $region27: #{tpu_custom_call.1} parent=5 // pred_region
        %s152 = ssub.s32 %s14, 1
        %s153 = sand.u32 %s41, 1
        %s154 = scalar_lea.sflag [#allocation3], %s153
        %s155 = sand.u32 %s41, 1
        %s156 = smul.addr %s155, 8
        %s157 = scalar_lea.vmem [#allocation2], %s156
        // Predicated region
        $region29: #{tpu_custom_call.1} parent=27 // pred_check
          %p158 = pneg %p54
        $region30: #{tpu_custom_call.1} parent=27 // pred_check_branch
          %160 = sbr.rel (%p158) target = $region32
        $region31: #{tpu_custom_call.1} parent=27 // pred_region
          %161 = dma.done %s154, 128
        $region32: #{tpu_custom_call.1} parent=27 // pred_fallthru
          _
        %s162 = sand.u32 %s41, 1
        %s163 = scalar_lea.sflag [#allocation3], %s162
        %s164 = sand.u32 %s41, 1
        %s165 = smul.addr %s164, 8
        %s166 = scalar_lea.vmem [#allocation2], %s165
        %p167 = pneg %p54
        %p168 = pneg %p51
        %p169 = pneg %p75
        %p170 = pneg %p72
        %p171 = pneg %p103
        %p172 = pneg %p100
        %s173 = sand.u32 %s90, 1
        %s174 = scalar_lea.sflag [#allocation4], %s173
        %s175 = sand.u32 %s90, 1
        %s176 = smul.addr %s175, 16
        %s177 = scalar_lea.vmem [#allocation5], %s176
        %s178 = smul.u32 2, %s24
        %s179 = smul.u32 2, %s24
        %v180 = vld [vmem:[%s1] sm:$0xff]
        %v181 = vld [vmem:[%s157] sm:$0xff]
        %v183 = vcombine.high %v181, %v181
        %vm184 = vcmask 31744
        %v186 = vsel %vm184, %v180, 0
        %vm188 = vcmask 1043456
        %v189 = vsel %vm188, %v181, 0
        %v191 = vsel %vm188, %v183, 0
        %193 = vmatprep.subr.mxu0 %v191
        %194 = vmatpush1.msra.mxu0 %v189
        %195 = vmatprep.subr.mxu0 0.0
        %196 = vmatpush1.msra.mxu0 0.0
        %197 = vmatprep.subr.mxu0 0.0
        %198 = vmatpush1.msra.mxu0 0.0
        %199 = vmatprep.subr.mxu0 0.0
        %200 = vmatpush1.msra.mxu0 0.0
        %201 = vmatprep.subr.mxu0 0.0
        %202 = vmatpush1.msra.mxu0 0.0
        %203 = vmatprep.subr.mxu0 0.0
        %204 = vmatpush1.msra.mxu0 0.0
        %205 = vmatprep.subr.mxu0 0.0
        %206 = vmatpush1.msra.mxu0 0.0
        %207 = vmatprep.subr.mxu0 0.0
        %208 = vmatpush1.msra.mxu0 0.0
        %209 = vmatprep.subr.mxu0 0.0
        %210 = vmatpush1.msra.mxu0 0.0
        %211 = vmatprep.subr.mxu0 0.0
        %212 = vmatpush1.msra.mxu0 0.0
        %213 = vmatprep.subr.mxu0 0.0
        %214 = vmatpush1.msra.mxu0 0.0
        %215 = vmatprep.subr.mxu0 0.0
        %216 = vmatpush1.msra.mxu0 0.0
        %217 = vmatprep.subr.mxu0 0.0
        %218 = vmatpush1.msra.mxu0 0.0
        %219 = vmatprep.subr.mxu0 0.0
        %220 = vmatpush1.msra.mxu0 0.0
        %221 = vmatprep.subr.mxu0 0.0
        %222 = vmatpush1.msra.mxu0 0.0
        %223 = vmatprep.subr.mxu0 0.0
        %224 = vmatpush1.msra.mxu0 0.0
        %225 = vmatprep.subr.mxu0 0.0
        %226 = vmatpush1.msra.mxu0 0.0
        %227 = vmatprep.subr.mxu0 0.0
        %228 = vmatpush1.msra.mxu0 0.0
        %229 = vmatprep.subr.mxu0 0.0
        %230 = vmatpush1.msra.mxu0 0.0
        %231 = vmatprep.subr.mxu0 0.0
        %232 = vmatpush1.msra.mxu0 0.0
        %233 = vmatprep.subr.mxu0 0.0
        %234 = vmatpush1.msra.mxu0 0.0
        %235 = vmatprep.subr.mxu0 0.0
        %236 = vmatpush1.msra.mxu0 0.0
        %237 = vmatprep.subr.mxu0 0.0
        %238 = vmatpush1.msra.mxu0 0.0
        %239 = vmatprep.subr.mxu0 0.0
        %240 = vmatpush1.msra.mxu0 0.0
        %241 = vmatprep.subr.mxu0 0.0
        %242 = vmatpush1.msra.mxu0 0.0
        %243 = vmatprep.subr.mxu0 0.0
        %244 = vmatpush1.msra.mxu0 0.0
        %245 = vmatprep.subr.mxu0 0.0
        %246 = vmatpush1.msra.mxu0 0.0
        %247 = vmatprep.subr.mxu0 0.0
        %248 = vmatpush1.msra.mxu0 0.0
        %249 = vmatprep.subr.mxu0 0.0
        %250 = vmatpush1.msra.mxu0 0.0
        %251 = vmatprep.subr.mxu0 0.0
        %252 = vmatpush1.msra.mxu0 0.0
        %253 = vmatprep.subr.mxu0 0.0
        %254 = vmatpush1.msra.mxu0 0.0
        %255 = vmatprep.subr.mxu0 0.0
        %256 = vmatpush1.msra.mxu0 0.0
        %257 = vmatprep.mubr.f32.mxu0 0.0
        %258 = vmatmul.mubr.f32.gmra.mrb[0].mxu0 %v186
        %v259 = vpop.f32.mrb[0].mxu0
        %v260 = vadd.f32 0.0, %v259
        %v261 = vpop.f32.mrb[0].mxu0
        %v262 = vadd.f32 0.0, %v261
        %263 = vdwg.mxu0
        %264 = vst [vmem:[%s177] sm:$0xff] %v260
        %265 = vst [vmem:[%s177 + $0x8] sm:$0xff] %v262
        %s266 = sand.u32 %s90, 1
        %s267 = scalar_lea.sflag [#allocation4], %s266
        %s268 = sand.u32 %s90, 1
        %s269 = smul.addr %s268, 16
        %s270 = scalar_lea.vmem [#allocation5], %s269
        // Predicated region
        $region33: #{tpu_custom_call.1} parent=27 // pred_check
          %p271 = pneg %p100
        $region34: #{tpu_custom_call.1} parent=27 // pred_check_branch
          %273 = sbr.rel (%p271) target = $region36
        $region35: #{tpu_custom_call.1} parent=27 // pred_region
          %s274 = smul.u32 2, %s24
          %s276 = ssub.s32 256, 256
          %277 = vsyncadd %s267, %s276
          %s278 = smul.addr %s23, 2
          %s279 = sadd.s32 %s274, %s278
          %s280 = smul.addr %s279, 128
          %s281 = scalar_lea.hbm %s2, %s280
          %s283 = sshll.u32 %s270, 4
          %s284 = int_to_ptr.vmem [resolvable:$true] %s283
          %286 = dma.vmem_to_hbm [thread:$0]  %s284, 256, %s281, %s267
        $region36: #{tpu_custom_call.1} parent=27 // pred_fallthru
          _
      $region28: #{tpu_custom_call.1} parent=5 // pred_fallthru
        _
      %p287 = scmp.le.s32.totalorder 2, %s14
      // Predicated region
      $region37: #{tpu_custom_call.1} parent=5 // pred_check
        %p288 = pneg %p287
      $region38: #{tpu_custom_call.1} parent=5 // pred_check_branch
        %290 = sbr.rel (%p288) target = $region40
      $region39: #{tpu_custom_call.1} parent=5 // pred_region
        %s291 = ssub.s32 %s14, 2
        // Predicated region
        $region41: #{tpu_custom_call.1} parent=39 // pred_check
          %p292 = pneg %p106
        $region42: #{tpu_custom_call.1} parent=39 // pred_check_branch
          %294 = sbr.rel (%p292) target = $region44
        $region43: #{tpu_custom_call.1} parent=39 // pred_region
          %s295 = sand.u32 %s91, 1
          %s296 = scalar_lea.sflag [#allocation4], %s295
          %s297 = sand.u32 %s91, 1
          %s298 = smul.addr %s297, 16
          %s299 = scalar_lea.vmem [#allocation5], %s298
          %300 = dma.done %s296, 256
        $region44: #{tpu_custom_call.1} parent=39 // pred_fallthru
          _
      $region40: #{tpu_custom_call.1} parent=5 // pred_fallthru
        _
    $region6: #{tpu_custom_call.1} parent=1 // loop_footer
      %s18 = sadd.s32 1, %s14
    $region7: #{tpu_custom_call.1} parent=1 // loop_footer_branch
      %13 = sbr.rel target = $region3
    $region8: #{tpu_custom_call.1} parent=1 // loop_exit
      _
    %301 = vsyncpa [#allocation3], 1
    %s302 = scalar_lea.sflag [#allocation3], 1
    %303 = vsyncpa %s302, 1
    %304 = vsyncpa [#allocation4], 1
    %s305 = scalar_lea.sflag [#allocation4], 1
    %306 = vsyncpa %s305, 1

</llo_original>
